<compile_context>
chip_gen: v5e
topology: v5e:2x2
jax: 0.10.0
libtpu: 0.0.40
codegen_flags: <defaults>
</compile_context>

<pallas_src>
import functools

import jax
import jax.numpy as jnp
from jax.experimental import pallas as pl
from jax.experimental.pallas import tpu as pltpu


def _round_up(v, m):
    return -(-v // m) * m


def _choose_tb(B, N, din, dout, itemsize=4, vmem_budget=4 * 1024 * 1024):
    """Batch-block size: multiple of 8, sized to a conservative VMEM budget."""
    # bytes of pipelined inputs per batch element, x2 for double buffering
    per_b = (din + N * din + N * dout + N + dout) * itemsize * 2
    tb = max(8, vmem_budget // max(per_b, 1))
    tb = min(tb, 128, _round_up(B, 8))
    return int(max(8, (tb // 8) * 8))


def _tf_kernel(*refs, has_logw):
    if has_logw:
        (x_ref, x0_ref, y0_ref, logw_ref,
         we_ref, be_ref, wrx_ref, wrx0_ref, wry_ref, br_ref, out_ref) = refs
    else:
        (x_ref, x0_ref, y0_ref,
         we_ref, be_ref, wrx_ref, wrx0_ref, wry_ref, br_ref, out_ref) = refs
        logw_ref = None

    x = x_ref[...]            # (TB, din)
    x0 = x0_ref[...]          # (TB, N, din)
    y0 = y0_ref[...]          # (TB, N, dout)

    tb, n, din = x0.shape
    dout = y0.shape[-1]

    we = we_ref[...]          # (din, hid)   (possibly bf16)
    be = be_ref[...]          # (1, hid)     f32
    wrx = wrx_ref[...]        # (hid, dout)
    wrx0 = wrx0_ref[...]      # (hid, dout)
    wry = wry_ref[...]        # (dout, dout)
    br = br_ref[...]          # (1, dout)    f32

    def leaky(h):
        # LeakyReLU, default negative_slope=0.01, in f32 (accumulator dtype)
        return jnp.where(h > 0, h, 0.01 * h)

    # enc(x): (TB, hid) -- full TB rows, no degenerate M=1 matmul.
    hx = leaky(jnp.dot(x, we, preferred_element_type=jnp.float32) + be)

    # enc(x0): one merged matmul over TB*N rows.
    x0f = x0.reshape(tb * n, din)
    h0 = leaky(jnp.dot(x0f, we, preferred_element_type=jnp.float32) + be)

    # res(cat(hx_rep, enc(x0), y0)) == hx@Wr_x + enc(x0)@Wr_x0 + y0@Wr_y + br
    y0f = y0.reshape(tb * n, dout)
    zf = (jnp.dot(h0, wrx0, preferred_element_type=jnp.float32)
          + jnp.dot(y0f, wry, preferred_element_type=jnp.float32))
    base = jnp.dot(hx, wrx, preferred_element_type=jnp.float32) + br    # (TB, dout)
    y = zf.reshape(tb, n, dout) + base[:, None, :]                      # (TB, N, dout)

    if has_logw:
        # Softmax over N on the lane axis (logw is (TB, 1, N)), then weighted
        # sum over N as an MXU batched matvec: (TB,1,N) x (TB,N,dout).
        lw = logw_ref[...]                                    # (TB, 1, N) f32
        m = jnp.max(lw, axis=-1, keepdims=True)
        e = jnp.exp(lw - m)
        sm = e * pl.reciprocal(jnp.sum(e, axis=-1, keepdims=True), approx=True)
        out = jnp.einsum('bqn,bnd->bqd', sm, y,
                         preferred_element_type=jnp.float32)  # (TB, 1, dout)
    else:
        # softmax of all-zeros == uniform weights -> plain mean over N.
        out = jnp.mean(y, axis=1, keepdims=True)              # (TB, 1, dout)

    out_ref[...] = out.astype(out_ref.dtype)


def tf_forward(x, x0, y0, logw, params, *, compute_dtype=jnp.float32, tb=None):
    """x: (B, din), x0: (B, N, din), y0: (B, N, dout), logw: (B, N) or None."""
    B, din = x.shape
    _, N, _ = x0.shape
    dout = y0.shape[-1]
    hid = params["we"].shape[1]

    has_logw = logw is not None

    if tb is None:
        tb = _choose_tb(B, N, din, dout)
    B_pad = _round_up(B, tb)

    def pad_b(a):
        if B_pad == B:
            return a
        pad = [(0, B_pad - B)] + [(0, 0)] * (a.ndim - 1)
        return jnp.pad(a, pad)

    cast = lambda a: a.astype(compute_dtype)

    x_p = pad_b(cast(x))
    x0_p = pad_b(cast(x0))
    y0_p = pad_b(cast(y0))

    # Weights: matmul operands may be bf16; biases stay f32 (added to f32 acc).
    we = cast(params["we"])                          # (din, hid)
    be = params["be"].reshape(1, hid).astype(jnp.float32)
    wr = params["wr"]                                # (2*hid + dout, dout)
    wrx = cast(wr[:hid])                             # multiplies enc(x)
    wrx0 = cast(wr[hid:2 * hid])                     # multiplies enc(x0)
    wry = cast(wr[2 * hid:])                         # multiplies y0
    br = params["br"].reshape(1, dout).astype(jnp.float32)

    inputs = [x_p, x0_p, y0_p]
    in_specs = [
        pl.BlockSpec((tb, din), lambda b: (b, 0)),        # x
        pl.BlockSpec((tb, N, din), lambda b: (b, 0, 0)),  # x0
        pl.BlockSpec((tb, N, dout), lambda b: (b, 0, 0)), # y0
    ]
    if has_logw:
        # Lane-major logw: N on the lane axis.
        logw_p = pad_b(logw.reshape(B, 1, N).astype(jnp.float32))
        inputs.append(logw_p)
        in_specs.append(pl.BlockSpec((tb, 1, N), lambda b: (b, 0, 0)))

    full = lambda shape: pl.BlockSpec(shape, lambda b, _s=len(None or ()): (0,) * len(shape))
    full = lambda shape: pl.BlockSpec(shape, (lambda nd: (lambda b: (0,) * nd))(len(shape)))
    inputs += [we, be, wrx, wrx0, wry, br]
    in_specs += [full(we.shape), full(be.shape), full(wrx.shape),
                 full(wrx0.shape), full(wry.shape), full(br.shape)]

    kernel = functools.partial(_tf_kernel, has_logw=has_logw)

    out = pl.pallas_call(
        kernel,
        out_shape=jax.ShapeDtypeStruct((B_pad, 1, dout), jnp.float32),
        grid_spec=pltpu.PrefetchScalarGridSpec(
            num_scalar_prefetch=0,
            grid=(B_pad // tb,),
            in_specs=in_specs,
            out_specs=pl.BlockSpec((tb, 1, dout), lambda b: (b, 0, 0)),
        ),
        compiler_params=pltpu.CompilerParams(
            dimension_semantics=("parallel",)),
    )(*inputs)

    return out[:B, 0, :]


def init_params(key, din, hid, dout):
    k1, k2, k3, k4 = jax.random.split(key, 4)
    # Deterministic synthetic init (not a checkpoint load); stored already
    # transposed relative to torch (in_features, out_features).
    we = jax.random.normal(k1, (din, hid), jnp.float32) * 0.1
    be = jax.random.normal(k2, (hid,), jnp.float32) * 0.1
    wr = jax.random.normal(k3, (2 * hid + dout, dout), jnp.float32) * 0.1
    br = jax.random.normal(k4, (dout,), jnp.float32) * 0.1
    return {"we": we, "be": be, "wr": wr, "br": br}


def _reference(x, x0, y0, logw, params):
    """Pure-JAX reference mirroring the PyTorch forward, for a sanity check."""
    we, be, wr, br = params["we"], params["be"], params["wr"], params["br"]
    enc = lambda v: jax.nn.leaky_relu(v @ we + be, negative_slope=0.01)
    B, N, _ = x0.shape
    hx = jnp.repeat(enc(x)[:, None, :], N, axis=1)
    cat = jnp.concatenate((hx, enc(x0), y0), axis=-1)
    y = cat @ wr + br
    w = y0 * 0
    if logw is not None:
        w = w + logw[..., None]
    return (y * jax.nn.softmax(w, axis=1)).sum(axis=1)


if __name__ == "__main__":
    # Small shapes consistent with the module (hid=64 as in the original file).
    B, N, din, hid, dout = 12, 8, 16, 64, 8

    key = jax.random.PRNGKey(0)
    kx, kx0, ky0, klw, kp = jax.random.split(key, 5)
    x = jax.random.normal(kx, (B, din), jnp.float32)
    x0 = jax.random.normal(kx0, (B, N, din), jnp.float32)
    y0 = jax.random.normal(ky0, (B, N, dout), jnp.float32)
    logw = jax.random.normal(klw, (B, N), jnp.float32)

    params = init_params(kp, din, hid, dout)

    # 1) f32 path, with logw (auto TB -> single block here)
    out = tf_forward(x, x0, y0, logw, params)
    jax.block_until_ready(out)
    ref = _reference(x, x0, y0, logw, params)
    assert out.shape == (B, dout)
    assert jnp.allclose(out, ref, atol=2e-3, rtol=2e-3), "mismatch with logw"

    # 2) f32 path, logw=None (short-circuit: uniform weights, no softmax) and
    #    tb=8 -> B padded to 16, grid of 2 steps (exercises blocking + padding)
    out_n = tf_forward(x, x0, y0, None, params, tb=8)
    jax.block_until_ready(out_n)
    ref_n = _reference(x, x0, y0, None, params)
    assert jnp.allclose(out_n, ref_n, atol=2e-3, rtol=2e-3), "mismatch w/o logw"

    # 3) bf16 matmul inputs (v6e/v7x path); f32 accumulation + f32 elementwise
    out_bf = tf_forward(x, x0, y0, logw, params,
                        compute_dtype=jnp.bfloat16, tb=8)
    jax.block_until_ready(out_bf)
    assert jnp.allclose(out_bf, ref, atol=5e-2, rtol=5e-2), "mismatch bf16 path"

    print("KERNEL_OK")
</pallas_src>

<mosaic_0001>
module attributes {stable_mosaic.version = 11 : i64} {
  func.func @_tf_kernel(%arg0: i32, %arg1: memref<16x16xf32, #tpu.memory_space<vmem>>, %arg2: memref<16x8x16xf32, #tpu.memory_space<vmem>>, %arg3: memref<16x8x8xf32, #tpu.memory_space<vmem>>, %arg4: memref<16x1x8xf32, #tpu.memory_space<vmem>>, %arg5: memref<16x64xf32, #tpu.memory_space<vmem>>, %arg6: memref<1x64xf32, #tpu.memory_space<vmem>>, %arg7: memref<64x8xf32, #tpu.memory_space<vmem>>, %arg8: memref<64x8xf32, #tpu.memory_space<vmem>>, %arg9: memref<8x8xf32, #tpu.memory_space<vmem>>, %arg10: memref<1x8xf32, #tpu.memory_space<vmem>>, %arg11: memref<16x1x8xf32, #tpu.memory_space<vmem>>) attributes {dimension_semantics = [#tpu.dimension_semantics<parallel>], iteration_bounds = array<i64: 1>, scalar_prefetch = 0 : i64, scratch_operands = 0 : i64, tpu.core_type = #tpu.core_type<tc>, window_params = [{transform_indices = @transform_0, window_bounds = array<i64: 16, 16>}, {transform_indices = @transform_1, window_bounds = array<i64: 16, 8, 16>}, {transform_indices = @transform_2, window_bounds = array<i64: 16, 8, 8>}, {transform_indices = @transform_3, window_bounds = array<i64: 16, 1, 8>}, {pipeline_mode = #tpu.pipeline_mode<synchronous>, transform_indices = @transform_4, window_bounds = array<i64: 16, 64>}, {pipeline_mode = #tpu.pipeline_mode<synchronous>, transform_indices = @transform_5, window_bounds = array<i64: 1, 64>}, {pipeline_mode = #tpu.pipeline_mode<synchronous>, transform_indices = @transform_6, window_bounds = array<i64: 64, 8>}, {pipeline_mode = #tpu.pipeline_mode<synchronous>, transform_indices = @transform_7, window_bounds = array<i64: 64, 8>}, {pipeline_mode = #tpu.pipeline_mode<synchronous>, transform_indices = @transform_8, window_bounds = array<i64: 8, 8>}, {pipeline_mode = #tpu.pipeline_mode<synchronous>, transform_indices = @transform_9, window_bounds = array<i64: 1, 8>}, {transform_indices = @transform_10, window_bounds = array<i64: 16, 1, 8>}]} {
    %c0 = arith.constant 0 : index
    %c0_0 = arith.constant 0 : index
    %0 = vector.load %arg1[%c0, %c0_0] : memref<16x16xf32, #tpu.memory_space<vmem>>, vector<16x16xf32>
    %c0_1 = arith.constant 0 : index
    %c0_2 = arith.constant 0 : index
    %c0_3 = arith.constant 0 : index
    %1 = vector.load %arg2[%c0_1, %c0_2, %c0_3] : memref<16x8x16xf32, #tpu.memory_space<vmem>>, vector<16x8x16xf32>
    %c0_4 = arith.constant 0 : index
    %c0_5 = arith.constant 0 : index
    %c0_6 = arith.constant 0 : index
    %2 = vector.load %arg3[%c0_4, %c0_5, %c0_6] : memref<16x8x8xf32, #tpu.memory_space<vmem>>, vector<16x8x8xf32>
    %c0_7 = arith.constant 0 : index
    %c0_8 = arith.constant 0 : index
    %3 = vector.load %arg5[%c0_7, %c0_8] : memref<16x64xf32, #tpu.memory_space<vmem>>, vector<16x64xf32>
    %c0_9 = arith.constant 0 : index
    %c0_10 = arith.constant 0 : index
    %4 = vector.load %arg6[%c0_9, %c0_10] : memref<1x64xf32, #tpu.memory_space<vmem>>, vector<1x64xf32>
    %c0_11 = arith.constant 0 : index
    %c0_12 = arith.constant 0 : index
    %5 = vector.load %arg7[%c0_11, %c0_12] : memref<64x8xf32, #tpu.memory_space<vmem>>, vector<64x8xf32>
    %c0_13 = arith.constant 0 : index
    %c0_14 = arith.constant 0 : index
    %6 = vector.load %arg8[%c0_13, %c0_14] : memref<64x8xf32, #tpu.memory_space<vmem>>, vector<64x8xf32>
    %c0_15 = arith.constant 0 : index
    %c0_16 = arith.constant 0 : index
    %7 = vector.load %arg9[%c0_15, %c0_16] : memref<8x8xf32, #tpu.memory_space<vmem>>, vector<8x8xf32>
    %c0_17 = arith.constant 0 : index
    %c0_18 = arith.constant 0 : index
    %8 = vector.load %arg10[%c0_17, %c0_18] : memref<1x8xf32, #tpu.memory_space<vmem>>, vector<1x8xf32>
    %cst = arith.constant dense<0.000000e+00> : vector<16x64xf32>
    %9 = tpu.matmul %0, %3, %cst {dimension_numbers = #tpu.dot_dimension_numbers<[1], [0], [0], [1], [0, 0, 1, 1], [], []>} : vector<16x16xf32>, vector<16x64xf32>, vector<16x64xf32> -> vector<16x64xf32>
    %10 = vector.broadcast %4 : vector<1x64xf32> to vector<16x64xf32>
    %11 = arith.addf %9, %10 : vector<16x64xf32>
    %cst_19 = arith.constant 0.000000e+00 : f32
    %12 = vector.broadcast %cst_19 : f32 to vector<16x64xf32>
    %13 = arith.cmpf ogt, %11, %12 : vector<16x64xf32>
    %cst_20 = arith.constant 0.00999999977 : f32
    %14 = vector.broadcast %cst_20 : f32 to vector<16x64xf32>
    %15 = arith.mulf %14, %11 : vector<16x64xf32>
    %16 = arith.select %13, %11, %15 : vector<16x64xi1>, vector<16x64xf32>
    %17 = vector.shape_cast %1 : vector<16x8x16xf32> to vector<128x16xf32>
    %cst_21 = arith.constant dense<0.000000e+00> : vector<128x64xf32>
    %18 = tpu.matmul %17, %3, %cst_21 {dimension_numbers = #tpu.dot_dimension_numbers<[1], [0], [0], [1], [0, 0, 1, 1], [], []>} : vector<128x16xf32>, vector<16x64xf32>, vector<128x64xf32> -> vector<128x64xf32>
    %19 = vector.broadcast %4 : vector<1x64xf32> to vector<128x64xf32>
    %20 = arith.addf %18, %19 : vector<128x64xf32>
    %cst_22 = arith.constant 0.000000e+00 : f32
    %21 = vector.broadcast %cst_22 : f32 to vector<128x64xf32>
    %22 = arith.cmpf ogt, %20, %21 : vector<128x64xf32>
    %cst_23 = arith.constant 0.00999999977 : f32
    %23 = vector.broadcast %cst_23 : f32 to vector<128x64xf32>
    %24 = arith.mulf %23, %20 : vector<128x64xf32>
    %25 = arith.select %22, %20, %24 : vector<128x64xi1>, vector<128x64xf32>
    %26 = vector.shape_cast %2 : vector<16x8x8xf32> to vector<128x8xf32>
    %cst_24 = arith.constant dense<0.000000e+00> : vector<128x8xf32>
    %27 = tpu.matmul %25, %6, %cst_24 {dimension_numbers = #tpu.dot_dimension_numbers<[1], [0], [0], [1], [0, 0, 1, 1], [], []>} : vector<128x64xf32>, vector<64x8xf32>, vector<128x8xf32> -> vector<128x8xf32>
    %cst_25 = arith.constant dense<0.000000e+00> : vector<128x8xf32>
    %28 = tpu.matmul %26, %7, %cst_25 {dimension_numbers = #tpu.dot_dimension_numbers<[1], [0], [0], [1], [0, 0, 1, 1], [], []>} : vector<128x8xf32>, vector<8x8xf32>, vector<128x8xf32> -> vector<128x8xf32>
    %29 = arith.addf %27, %28 : vector<128x8xf32>
    %cst_26 = arith.constant dense<0.000000e+00> : vector<16x8xf32>
    %30 = tpu.matmul %16, %5, %cst_26 {dimension_numbers = #tpu.dot_dimension_numbers<[1], [0], [0], [1], [0, 0, 1, 1], [], []>} : vector<16x64xf32>, vector<64x8xf32>, vector<16x8xf32> -> vector<16x8xf32>
    %31 = vector.broadcast %8 : vector<1x8xf32> to vector<16x8xf32>
    %32 = arith.addf %30, %31 : vector<16x8xf32>
    %33 = vector.shape_cast %29 : vector<128x8xf32> to vector<16x8x8xf32>
    %34 = vector.shape_cast %32 : vector<16x8xf32> to vector<16x1x8xf32>
    %35 = vector.broadcast %34 : vector<16x1x8xf32> to vector<16x8x8xf32>
    %36 = arith.addf %33, %35 : vector<16x8x8xf32>
    %c0_27 = arith.constant 0 : index
    %c0_28 = arith.constant 0 : index
    %c0_29 = arith.constant 0 : index
    %37 = vector.load %arg4[%c0_27, %c0_28, %c0_29] : memref<16x1x8xf32, #tpu.memory_space<vmem>>, vector<16x1x8xf32>
    %cst_30 = arith.constant dense<0xFF800000> : vector<16x1xf32>
    %38 = vector.multi_reduction <maximumf>, %37, %cst_30 [2] : vector<16x1x8xf32> to vector<16x1xf32>
    %39 = vector.shape_cast %38 : vector<16x1xf32> to vector<16x1x1xf32>
    %40 = vector.broadcast %39 : vector<16x1x1xf32> to vector<16x1x8xf32>
    %41 = arith.subf %37, %40 : vector<16x1x8xf32>
    %42 = math.exp %41 : vector<16x1x8xf32>
    %cst_31 = arith.constant dense<0.000000e+00> : vector<16x1xf32>
    %43 = vector.multi_reduction <add>, %42, %cst_31 [2] : vector<16x1x8xf32> to vector<16x1xf32>
    %44 = vector.shape_cast %43 : vector<16x1xf32> to vector<16x1x1xf32>
    %45 = tpu.reciprocal %44 {approx = true} : vector<16x1x1xf32> -> vector<16x1x1xf32>
    %46 = vector.broadcast %45 : vector<16x1x1xf32> to vector<16x1x8xf32>
    %47 = arith.mulf %42, %46 : vector<16x1x8xf32>
    "tpu.trace_start"() <{level = 10 : i32, message = "bqn,bnd->bqd"}> : () -> ()
    %cst_32 = arith.constant dense<0.000000e+00> : vector<16x1x8xf32>
    %48 = tpu.matmul %47, %36, %cst_32 {dimension_numbers = #tpu.dot_dimension_numbers<[2], [1], [1], [2], [0, 0, 0, 1, 1, 2], [0], [0]>} : vector<16x1x8xf32>, vector<16x8x8xf32>, vector<16x1x8xf32> -> vector<16x1x8xf32>
    "tpu.trace_stop"() : () -> ()
    %c0_33 = arith.constant 0 : index
    %c0_34 = arith.constant 0 : index
    %c0_35 = arith.constant 0 : index
    %49 = vector.load %arg11[%c0_33, %c0_34, %c0_35] : memref<16x1x8xf32, #tpu.memory_space<vmem>>, vector<16x1x8xf32>
    tpu.vector_store %arg11[%c0_33, %c0_34, %c0_35], %48 {strides = array<i32>} : memref<16x1x8xf32, #tpu.memory_space<vmem>>, vector<16x1x8xf32>,
    return
  }
  func.func @transform_0(%arg0: i32) -> (i32, i32) {
    %c0_i32 = arith.constant 0 : i32
    %c0_i32_0 = arith.constant 0 : i32
    return %arg0, %c0_i32 : i32, i32
  }
  func.func @transform_1(%arg0: i32) -> (i32, i32, i32) {
    %c0_i32 = arith.constant 0 : i32
    %c0_i32_0 = arith.constant 0 : i32
    %c0_i32_1 = arith.constant 0 : i32
    return %arg0, %c0_i32, %c0_i32_0 : i32, i32, i32
  }
  func.func @transform_2(%arg0: i32) -> (i32, i32, i32) {
    %c0_i32 = arith.constant 0 : i32
    %c0_i32_0 = arith.constant 0 : i32
    %c0_i32_1 = arith.constant 0 : i32
    return %arg0, %c0_i32, %c0_i32_0 : i32, i32, i32
  }
  func.func @transform_3(%arg0: i32) -> (i32, i32, i32) {
    %c0_i32 = arith.constant 0 : i32
    %c0_i32_0 = arith.constant 0 : i32
    %c0_i32_1 = arith.constant 0 : i32
    return %arg0, %c0_i32, %c0_i32_0 : i32, i32, i32
  }
  func.func @transform_4(%arg0: i32) -> (i32, i32) {
    %c0_i32 = arith.constant 0 : i32
    %c0_i32_0 = arith.constant 0 : i32
    %c0_i32_1 = arith.constant 0 : i32
    return %c0_i32, %c0_i32_0 : i32, i32
  }
  func.func @transform_5(%arg0: i32) -> (i32, i32) {
    %c0_i32 = arith.constant 0 : i32
    %c0_i32_0 = arith.constant 0 : i32
    %c0_i32_1 = arith.constant 0 : i32
    return %c0_i32, %c0_i32_0 : i32, i32
  }
  func.func @transform_6(%arg0: i32) -> (i32, i32) {
    %c0_i32 = arith.constant 0 : i32
    %c0_i32_0 = arith.constant 0 : i32
    %c0_i32_1 = arith.constant 0 : i32
    return %c0_i32, %c0_i32_0 : i32, i32
  }
  func.func @transform_7(%arg0: i32) -> (i32, i32) {
    %c0_i32 = arith.constant 0 : i32
    %c0_i32_0 = arith.constant 0 : i32
    %c0_i32_1 = arith.constant 0 : i32
    return %c0_i32, %c0_i32_0 : i32, i32
  }
  func.func @transform_8(%arg0: i32) -> (i32, i32) {
    %c0_i32 = arith.constant 0 : i32
    %c0_i32_0 = arith.constant 0 : i32
    %c0_i32_1 = arith.constant 0 : i32
    return %c0_i32, %c0_i32_0 : i32, i32
  }
  func.func @transform_9(%arg0: i32) -> (i32, i32) {
    %c0_i32 = arith.constant 0 : i32
    %c0_i32_0 = arith.constant 0 : i32
    %c0_i32_1 = arith.constant 0 : i32
    return %c0_i32, %c0_i32_0 : i32, i32
  }
  func.func @transform_10(%arg0: i32) -> (i32, i32, i32) {
    %c0_i32 = arith.constant 0 : i32
    %c0_i32_0 = arith.constant 0 : i32
    %c0_i32_1 = arith.constant 0 : i32
    return %arg0, %c0_i32, %c0_i32_0 : i32, i32, i32
  }
}

</mosaic_0001>

<llo_original>
// kernel: tpu_custom_call.1
$region0: #{tpu_custom_call.1}
  #allocation0 [shape = 'u32[]', space=smem, size = 0x4, offset = 0x4, fixed_abs, tag = 'smem constant byte address 0x4 - core index']
  #allocation1 [shape = 'u32[72,128]{1,0:T(1,128)}', space=vmem, size = 0x9000, scoped, tag = 'internal scratch']
  %s0 = inlined_call_operand.vmem [shape: f32[16,16], index: 0, kind: input, shape index: {}]
  %s1 = inlined_call_operand.vmem [shape: f32[16,8,16], index: 1, kind: input, shape index: {}]
  %s2 = inlined_call_operand.vmem [shape: f32[16,8,8], index: 2, kind: input, shape index: {}]
  %s3 = inlined_call_operand.vmem [shape: f32[16,1,8], index: 3, kind: input, shape index: {}]
  %s4 = inlined_call_operand.vmem [shape: f32[16,64], index: 4, kind: input, shape index: {}]
  %s5 = inlined_call_operand.vmem [shape: f32[1,64], index: 5, kind: input, shape index: {}]
  %s6 = inlined_call_operand.vmem [shape: f32[64,8], index: 6, kind: input, shape index: {}]
  %s7 = inlined_call_operand.vmem [shape: f32[64,8], index: 7, kind: input, shape index: {}]
  %s8 = inlined_call_operand.vmem [shape: f32[8,8], index: 8, kind: input, shape index: {}]
  %s9 = inlined_call_operand.vmem [shape: f32[1,8], index: 9, kind: input, shape index: {}]
  %s10 = inlined_call_operand.vmem [shape: f32[16,1,8], index: 10, kind: output, shape index: {}]
  %s11 = sld [smem:[#allocation0]]
  $region50: #{tpu_custom_call.1} parent=0
    _
  %s13 = ssub.s32 1, %s11
  %s14 = scalar_select 0, %s13, %s11
  // Predicated region
  $region2: #{tpu_custom_call.1} parent=0 // pred_check
    _
  $region3: #{tpu_custom_call.1} parent=0 // pred_check_branch
    %16 = sbr.rel (0) target = $region5
  $region4: #{tpu_custom_call.1} parent=0 // pred_region
    _
  $region5: #{tpu_custom_call.1} parent=0 // pred_fallthru
    _
  // Predicated region
  $region6: #{tpu_custom_call.1} parent=0 // pred_check
    _
  $region7: #{tpu_custom_call.1} parent=0 // pred_check_branch
    %18 = sbr.rel (0) target = $region9
  $region8: #{tpu_custom_call.1} parent=0 // pred_region
    _
  $region9: #{tpu_custom_call.1} parent=0 // pred_fallthru
    _
  // Predicated region
  $region10: #{tpu_custom_call.1} parent=0 // pred_check
    _
  $region11: #{tpu_custom_call.1} parent=0 // pred_check_branch
    %20 = sbr.rel (0) target = $region13
  $region12: #{tpu_custom_call.1} parent=0 // pred_region
    _
  $region13: #{tpu_custom_call.1} parent=0 // pred_fallthru
    _
  // Predicated region
  $region14: #{tpu_custom_call.1} parent=0 // pred_check
    _
  $region15: #{tpu_custom_call.1} parent=0 // pred_check_branch
    %22 = sbr.rel (0) target = $region17
  $region16: #{tpu_custom_call.1} parent=0 // pred_region
    _
  $region17: #{tpu_custom_call.1} parent=0 // pred_fallthru
    _
  // Predicated region
  $region18: #{tpu_custom_call.1} parent=0 // pred_check
    _
  $region19: #{tpu_custom_call.1} parent=0 // pred_check_branch
    %24 = sbr.rel (0) target = $region21
  $region20: #{tpu_custom_call.1} parent=0 // pred_region
    _
  $region21: #{tpu_custom_call.1} parent=0 // pred_fallthru
    _
  // Predicated region
  $region22: #{tpu_custom_call.1} parent=0 // pred_check
    _
  $region23: #{tpu_custom_call.1} parent=0 // pred_check_branch
    %26 = sbr.rel (0) target = $region25
  $region24: #{tpu_custom_call.1} parent=0 // pred_region
    _
  $region25: #{tpu_custom_call.1} parent=0 // pred_fallthru
    _
  // Predicated region
  $region26: #{tpu_custom_call.1} parent=0 // pred_check
    _
  $region27: #{tpu_custom_call.1} parent=0 // pred_check_branch
    %28 = sbr.rel (0) target = $region29
  $region28: #{tpu_custom_call.1} parent=0 // pred_region
    _
  $region29: #{tpu_custom_call.1} parent=0 // pred_fallthru
    _
  // Predicated region
  $region30: #{tpu_custom_call.1} parent=0 // pred_check
    _
  $region31: #{tpu_custom_call.1} parent=0 // pred_check_branch
    %30 = sbr.rel (0) target = $region33
  $region32: #{tpu_custom_call.1} parent=0 // pred_region
    _
  $region33: #{tpu_custom_call.1} parent=0 // pred_fallthru
    _
  // Predicated region
  $region34: #{tpu_custom_call.1} parent=0 // pred_check
    _
  $region35: #{tpu_custom_call.1} parent=0 // pred_check_branch
    %32 = sbr.rel (0) target = $region37
  $region36: #{tpu_custom_call.1} parent=0 // pred_region
    _
  $region37: #{tpu_custom_call.1} parent=0 // pred_fallthru
    _
  // Predicated region
  $region38: #{tpu_custom_call.1} parent=0 // pred_check
    _
  $region39: #{tpu_custom_call.1} parent=0 // pred_check_branch
    %34 = sbr.rel (0) target = $region41
  $region40: #{tpu_custom_call.1} parent=0 // pred_region
    _
  $region41: #{tpu_custom_call.1} parent=0 // pred_fallthru
    _
  %v35 = vld [vmem:[%s0] sm:$0xff]
  %v36 = vld [vmem:[%s0 + $0x8] sm:$0xff]
  %v37 = vld [vmem:[%s1] sm:$0xff]
  %v38 = vld [vmem:[%s1 + $0x8] sm:$0xff]
  %v39 = vld [vmem:[%s1 + $0x10] sm:$0xff]
  %v40 = vld [vmem:[%s1 + $0x18] sm:$0xff]
  %v41 = vld [vmem:[%s1 + $0x20] sm:$0xff]
  %v42 = vld [vmem:[%s1 + $0x28] sm:$0xff]
  %v43 = vld [vmem:[%s1 + $0x30] sm:$0xff]
  %v44 = vld [vmem:[%s1 + $0x38] sm:$0xff]
  %v45 = vld [vmem:[%s1 + $0x40] sm:$0xff]
  %v46 = vld [vmem:[%s1 + $0x48] sm:$0xff]
  %v47 = vld [vmem:[%s1 + $0x50] sm:$0xff]
  %v48 = vld [vmem:[%s1 + $0x58] sm:$0xff]
  %v49 = vld [vmem:[%s1 + $0x60] sm:$0xff]
  %v50 = vld [vmem:[%s1 + $0x68] sm:$0xff]
  %v51 = vld [vmem:[%s1 + $0x70] sm:$0xff]
  %v52 = vld [vmem:[%s1 + $0x78] sm:$0xff]
  %v53 = vld [vmem:[%s2] sm:$0xff]
  %v54 = vld [vmem:[%s2 + $0x8] sm:$0xff]
  %v55 = vld [vmem:[%s2 + $0x10] sm:$0xff]
  %v56 = vld [vmem:[%s2 + $0x18] sm:$0xff]
  %v57 = vld [vmem:[%s2 + $0x20] sm:$0xff]
  %v58 = vld [vmem:[%s2 + $0x28] sm:$0xff]
  %v59 = vld [vmem:[%s2 + $0x30] sm:$0xff]
  %v60 = vld [vmem:[%s2 + $0x38] sm:$0xff]
  %v61 = vld [vmem:[%s2 + $0x40] sm:$0xff]
  %v62 = vld [vmem:[%s2 + $0x48] sm:$0xff]
  %v63 = vld [vmem:[%s2 + $0x50] sm:$0xff]
  %v64 = vld [vmem:[%s2 + $0x58] sm:$0xff]
  %v65 = vld [vmem:[%s2 + $0x60] sm:$0xff]
  %v66 = vld [vmem:[%s2 + $0x68] sm:$0xff]
  %v67 = vld [vmem:[%s2 + $0x70] sm:$0xff]
  %v68 = vld [vmem:[%s2 + $0x78] sm:$0xff]
  %v69 = vld [vmem:[%s4] sm:$0xff]
  %v70 = vld [vmem:[%s4 + $0x8] sm:$0xff]
  %v71 = vld [vmem:[%s5] sm:$0x1]
  %v72 = vld [vmem:[%s6] sm:$0xff]
  %v73 = vld [vmem:[%s6 + $0x8] sm:$0xff]
  %v74 = vld [vmem:[%s6 + $0x10] sm:$0xff]
  %v75 = vld [vmem:[%s6 + $0x18] sm:$0xff]
  %v76 = vld [vmem:[%s6 + $0x20] sm:$0xff]
  %v77 = vld [vmem:[%s6 + $0x28] sm:$0xff]
  %v78 = vld [vmem:[%s6 + $0x30] sm:$0xff]
  %v79 = vld [vmem:[%s6 + $0x38] sm:$0xff]
  %v80 = vld [vmem:[%s7] sm:$0xff]
  %v81 = vld [vmem:[%s7 + $0x8] sm:$0xff]
  %v82 = vld [vmem:[%s7 + $0x10] sm:$0xff]
  %v83 = vld [vmem:[%s7 + $0x18] sm:$0xff]
  %v84 = vld [vmem:[%s7 + $0x20] sm:$0xff]
  %v85 = vld [vmem:[%s7 + $0x28] sm:$0xff]
  %v86 = vld [vmem:[%s7 + $0x30] sm:$0xff]
  %v87 = vld [vmem:[%s7 + $0x38] sm:$0xff]
  %v88 = vld [vmem:[%s8] sm:$0xff]
  %v89 = vld [vmem:[%s9] sm:$0x1]
  %v91 = vperm.slane %v71, 0
  %vm93 = vcmask 130048
  %v95 = vsel %vm93, %v35, 0
  %v98 = vsel %vm93, %v36, 0
  %100 = vmatpush.msra.mxu0 0.0
  %101 = vmatpush.msra.mxu0 0.0
  %102 = vmatpush.msra.mxu0 0.0
  %103 = vmatpush.msra.mxu0 0.0
  %104 = vmatpush.msra.mxu0 0.0
  %105 = vmatpush.msra.mxu0 0.0
  %106 = vmatpush.msra.mxu0 0.0
  %107 = vmatpush.msra.mxu0 0.0
  %108 = vmatpush.msra.mxu0 0.0
  %109 = vmatpush.msra.mxu0 0.0
  %110 = vmatpush.msra.mxu0 0.0
  %111 = vmatpush.msra.mxu0 0.0
  %112 = vmatpush.msra.mxu0 0.0
  %113 = vmatpush.msra.mxu0 0.0
  %114 = vmatpush.msra.mxu0 %v70
  %115 = vmatpush.msra.mxu0 %v69
  %116 = vmatmul.f32.gmra.mxu0 %v95
  %v117 = vpop.f32.mrf.mxu0
  %v118 = vadd.f32 %v91, %v117
  %119 = vmatmul.f32.gmra.mxu0 %v98
  %v120 = vpop.f32.mrf.mxu0
  %v121 = vadd.f32 %v91, %v120
  %122 = vdwg.mxu0
  %vm123 = vcmp.gt.f32.partialorder %v118, 0.0
  %vm124 = vcmp.gt.f32.partialorder %v121, 0.0
  %v125 = vmul.f32 %v118, 0.01
  %v126 = vmul.f32 %v121, 0.01
  %v127 = vsel %vm123, %v118, %v125
  %v128 = vsel %vm124, %v121, %v126
  %v130 = vsel %vm93, %v37, 0
  %v133 = vsel %vm93, %v38, 0
  %v136 = vsel %vm93, %v39, 0
  %v139 = vsel %vm93, %v40, 0
  %v142 = vsel %vm93, %v41, 0
  %v145 = vsel %vm93, %v42, 0
  %v148 = vsel %vm93, %v43, 0
  %v151 = vsel %vm93, %v44, 0
  %v154 = vsel %vm93, %v45, 0
  %v157 = vsel %vm93, %v46, 0
  %v160 = vsel %vm93, %v47, 0
  %v163 = vsel %vm93, %v48, 0
  %v166 = vsel %vm93, %v49, 0
  %v169 = vsel %vm93, %v50, 0
  %v172 = vsel %vm93, %v51, 0
  %v175 = vsel %vm93, %v52, 0
  %177 = vmatpush.msra.mxu0 0.0
  %178 = vmatpush.msra.mxu0 0.0
  %179 = vmatpush.msra.mxu0 0.0
  %180 = vmatpush.msra.mxu0 0.0
  %181 = vmatpush.msra.mxu0 0.0
  %182 = vmatpush.msra.mxu0 0.0
  %183 = vmatpush.msra.mxu0 0.0
  %184 = vmatpush.msra.mxu0 0.0
  %185 = vmatpush.msra.mxu0 0.0
  %186 = vmatpush.msra.mxu0 0.0
  %187 = vmatpush.msra.mxu0 0.0
  %188 = vmatpush.msra.mxu0 0.0
  %189 = vmatpush.msra.mxu0 0.0
  %190 = vmatpush.msra.mxu0 0.0
  %191 = vmatpush.msra.mxu0 %v70
  %192 = vmatpush.msra.mxu0 %v69
  %193 = vmatmul.f32.gmra.mxu0 %v130
  %v194 = vpop.f32.mrf.mxu0
  %v195 = vadd.f32 %v91, %v194
  %196 = vmatmul.f32.gmra.mxu0 %v133
  %v197 = vpop.f32.mrf.mxu0
  %v198 = vadd.f32 %v91, %v197
  %199 = vmatmul.f32.gmra.mxu0 %v136
  %v200 = vpop.f32.mrf.mxu0
  %v201 = vadd.f32 %v91, %v200
  %202 = vmatmul.f32.gmra.mxu0 %v139
  %v203 = vpop.f32.mrf.mxu0
  %v204 = vadd.f32 %v91, %v203
  %205 = vmatmul.f32.gmra.mxu0 %v142
  %v206 = vpop.f32.mrf.mxu0
  %v207 = vadd.f32 %v91, %v206
  %208 = vmatmul.f32.gmra.mxu0 %v145
  %v209 = vpop.f32.mrf.mxu0
  %v210 = vadd.f32 %v91, %v209
  %211 = vmatmul.f32.gmra.mxu0 %v148
  %v212 = vpop.f32.mrf.mxu0
  %v213 = vadd.f32 %v91, %v212
  %214 = vmatmul.f32.gmra.mxu0 %v151
  %v215 = vpop.f32.mrf.mxu0
  %v216 = vadd.f32 %v91, %v215
  %217 = vmatmul.f32.gmra.mxu0 %v154
  %v218 = vpop.f32.mrf.mxu0
  %v219 = vadd.f32 %v91, %v218
  %220 = vmatmul.f32.gmra.mxu0 %v157
  %v221 = vpop.f32.mrf.mxu0
  %v222 = vadd.f32 %v91, %v221
  %223 = vmatmul.f32.gmra.mxu0 %v160
  %v224 = vpop.f32.mrf.mxu0
  %v225 = vadd.f32 %v91, %v224
  %226 = vmatmul.f32.gmra.mxu0 %v163
  %v227 = vpop.f32.mrf.mxu0
  %v228 = vadd.f32 %v91, %v227
  %229 = vmatmul.f32.gmra.mxu0 %v166
  %v230 = vpop.f32.mrf.mxu0
  %v231 = vadd.f32 %v91, %v230
  %232 = vmatmul.f32.gmra.mxu0 %v169
  %v233 = vpop.f32.mrf.mxu0
  %v234 = vadd.f32 %v91, %v233
  %235 = vmatmul.f32.gmra.mxu0 %v172
  %v236 = vpop.f32.mrf.mxu0
  %v237 = vadd.f32 %v91, %v236
  %238 = vmatmul.f32.gmra.mxu0 %v175
  %v239 = vpop.f32.mrf.mxu0
  %v240 = vadd.f32 %v91, %v239
  %241 = vdwg.mxu0
  %vm242 = vcmp.gt.f32.partialorder %v195, 0.0
  %vm243 = vcmp.gt.f32.partialorder %v198, 0.0
  %vm244 = vcmp.gt.f32.partialorder %v201, 0.0
  %vm245 = vcmp.gt.f32.partialorder %v204, 0.0
  %vm246 = vcmp.gt.f32.partialorder %v207, 0.0
  %vm247 = vcmp.gt.f32.partialorder %v210, 0.0
  %vm248 = vcmp.gt.f32.partialorder %v213, 0.0
  %vm249 = vcmp.gt.f32.partialorder %v216, 0.0
  %vm250 = vcmp.gt.f32.partialorder %v219, 0.0
  %vm251 = vcmp.gt.f32.partialorder %v222, 0.0
  %vm252 = vcmp.gt.f32.partialorder %v225, 0.0
  %vm253 = vcmp.gt.f32.partialorder %v228, 0.0
  %vm254 = vcmp.gt.f32.partialorder %v231, 0.0
  %vm255 = vcmp.gt.f32.partialorder %v234, 0.0
  %vm256 = vcmp.gt.f32.partialorder %v237, 0.0
  %vm257 = vcmp.gt.f32.partialorder %v240, 0.0
  %v258 = vmul.f32 %v195, 0.01
  %v259 = vmul.f32 %v198, 0.01
  %v260 = vmul.f32 %v201, 0.01
  %v261 = vmul.f32 %v204, 0.01
  %v262 = vmul.f32 %v207, 0.01
  %v263 = vmul.f32 %v210, 0.01
  %v264 = vmul.f32 %v213, 0.01
  %v265 = vmul.f32 %v216, 0.01
  %v266 = vmul.f32 %v219, 0.01
  %v267 = vmul.f32 %v222, 0.01
  %v268 = vmul.f32 %v225, 0.01
  %v269 = vmul.f32 %v228, 0.01
  %v270 = vmul.f32 %v231, 0.01
  %v271 = vmul.f32 %v234, 0.01
  %v272 = vmul.f32 %v237, 0.01
  %v273 = vmul.f32 %v240, 0.01
  %v274 = vsel %vm242, %v195, %v258
  %v275 = vsel %vm243, %v198, %v259
  %v276 = vsel %vm244, %v201, %v260
  %v277 = vsel %vm245, %v204, %v261
  %v278 = vsel %vm246, %v207, %v262
  %v279 = vsel %vm247, %v210, %v263
  %v280 = vsel %vm248, %v213, %v264
  %v281 = vsel %vm249, %v216, %v265
  %v282 = vsel %vm250, %v219, %v266
  %v283 = vsel %vm251, %v222, %v267
  %v284 = vsel %vm252, %v225, %v268
  %v285 = vsel %vm253, %v228, %v269
  %v286 = vsel %vm254, %v231, %v270
  %v287 = vsel %vm255, %v234, %v271
  %v288 = vsel %vm256, %v237, %v272
  %v289 = vsel %vm257, %v240, %v273
  %vm290 = vcmask 64512
  %v292 = vsel %vm290, %v53, 0
  %v295 = vsel %vm290, %v54, 0
  %v298 = vsel %vm290, %v55, 0
  %v301 = vsel %vm290, %v56, 0
  %v304 = vsel %vm290, %v57, 0
  %v307 = vsel %vm290, %v58, 0
  %v310 = vsel %vm290, %v59, 0
  %v313 = vsel %vm290, %v60, 0
  %v316 = vsel %vm290, %v61, 0
  %v319 = vsel %vm290, %v62, 0
  %v322 = vsel %vm290, %v63, 0
  %v325 = vsel %vm290, %v64, 0
  %v328 = vsel %vm290, %v65, 0
  %v331 = vsel %vm290, %v66, 0
  %v334 = vsel %vm290, %v67, 0
  %v337 = vsel %vm290, %v68, 0
  %339 = vmatpush.msra.mxu0 0.0
  %340 = vmatpush.msra.mxu0 0.0
  %341 = vmatpush.msra.mxu0 0.0
  %342 = vmatpush.msra.mxu0 0.0
  %343 = vmatpush.msra.mxu0 0.0
  %344 = vmatpush.msra.mxu0 0.0
  %345 = vmatpush.msra.mxu0 0.0
  %346 = vmatpush.msra.mxu0 0.0
  %347 = vmatpush.msra.mxu0 0.0
  %348 = vmatpush.msra.mxu0 0.0
  %349 = vmatpush.msra.mxu0 0.0
  %350 = vmatpush.msra.mxu0 0.0
  %351 = vmatpush.msra.mxu0 0.0
  %352 = vmatpush.msra.mxu0 0.0
  %353 = vmatpush.msra.mxu0 0.0
  %354 = vmatpush.msra.mxu0 %v88
  %355 = vmatmul.f32.gmra.mxu0 %v292
  %v356 = vpop.f32.mrf.mxu0
  %v357 = vadd.f32 0.0, %v356
  %358 = vmatmul.f32.gmra.mxu0 %v295
  %v359 = vpop.f32.mrf.mxu0
  %v360 = vadd.f32 0.0, %v359
  %361 = vmatmul.f32.gmra.mxu0 %v298
  %v362 = vpop.f32.mrf.mxu0
  %v363 = vadd.f32 0.0, %v362
  %364 = vmatmul.f32.gmra.mxu0 %v301
  %v365 = vpop.f32.mrf.mxu0
  %v366 = vadd.f32 0.0, %v365
  %367 = vmatmul.f32.gmra.mxu0 %v304
  %v368 = vpop.f32.mrf.mxu0
  %v369 = vadd.f32 0.0, %v368
  %370 = vmatmul.f32.gmra.mxu0 %v307
  %v371 = vpop.f32.mrf.mxu0
  %v372 = vadd.f32 0.0, %v371
  %373 = vmatmul.f32.gmra.mxu0 %v310
  %v374 = vpop.f32.mrf.mxu0
  %v375 = vadd.f32 0.0, %v374
  %376 = vmatmul.f32.gmra.mxu0 %v313
  %v377 = vpop.f32.mrf.mxu0
  %v378 = vadd.f32 0.0, %v377
  %379 = vmatmul.f32.gmra.mxu0 %v316
  %v380 = vpop.f32.mrf.mxu0
  %v381 = vadd.f32 0.0, %v380
  %382 = vmatmul.f32.gmra.mxu0 %v319
  %v383 = vpop.f32.mrf.mxu0
  %v384 = vadd.f32 0.0, %v383
  %385 = vmatmul.f32.gmra.mxu0 %v322
  %v386 = vpop.f32.mrf.mxu0
  %v387 = vadd.f32 0.0, %v386
  %388 = vmatmul.f32.gmra.mxu0 %v325
  %v389 = vpop.f32.mrf.mxu0
  %v390 = vadd.f32 0.0, %v389
  %391 = vmatmul.f32.gmra.mxu0 %v328
  %v392 = vpop.f32.mrf.mxu0
  %v393 = vadd.f32 0.0, %v392
  %394 = vmatmul.f32.gmra.mxu0 %v331
  %v395 = vpop.f32.mrf.mxu0
  %v396 = vadd.f32 0.0, %v395
  %397 = vmatmul.f32.gmra.mxu0 %v334
  %v398 = vpop.f32.mrf.mxu0
  %v399 = vadd.f32 0.0, %v398
  %400 = vmatmul.f32.gmra.mxu0 %v337
  %v401 = vpop.f32.mrf.mxu0
  %v402 = vadd.f32 0.0, %v401
  %403 = vdwg.mxu0
  %vm404 = vcmask 523264
  %v406 = vsel %vm404, %v274, 0
  %v409 = vsel %vm404, %v275, 0
  %v412 = vsel %vm404, %v276, 0
  %v415 = vsel %vm404, %v277, 0
  %v418 = vsel %vm404, %v278, 0
  %v421 = vsel %vm404, %v279, 0
  %v424 = vsel %vm404, %v280, 0
  %v427 = vsel %vm404, %v281, 0
  %v430 = vsel %vm404, %v282, 0
  %v433 = vsel %vm404, %v283, 0
  %v436 = vsel %vm404, %v284, 0
  %v439 = vsel %vm404, %v285, 0
  %v442 = vsel %vm404, %v286, 0
  %v445 = vsel %vm404, %v287, 0
  %v448 = vsel %vm404, %v288, 0
  %v451 = vsel %vm404, %v289, 0
  %453 = vmatpush.msra.mxu0 0.0
  %454 = vmatpush.msra.mxu0 0.0
  %455 = vmatpush.msra.mxu0 0.0
  %456 = vmatpush.msra.mxu0 0.0
  %457 = vmatpush.msra.mxu0 0.0
  %458 = vmatpush.msra.mxu0 0.0
  %459 = vmatpush.msra.mxu0 0.0
  %460 = vmatpush.msra.mxu0 0.0
  %461 = vmatpush.msra.mxu0 %v87
  %462 = vmatpush.msra.mxu0 %v86
  %463 = vmatpush.msra.mxu0 %v85
  %464 = vmatpush.msra.mxu0 %v84
  %465 = vmatpush.msra.mxu0 %v83
  %466 = vmatpush.msra.mxu0 %v82
  %467 = vmatpush.msra.mxu0 %v81
  %468 = vmatpush.msra.mxu0 %v80
  %469 = vmatmul.f32.gmra.mxu0 %v406
  %v470 = vpop.f32.mrf.mxu0
  %v471 = vadd.f32 %v357, %v470
  %472 = vmatmul.f32.gmra.mxu0 %v409
  %v473 = vpop.f32.mrf.mxu0
  %v474 = vadd.f32 %v360, %v473
  %475 = vmatmul.f32.gmra.mxu0 %v412
  %v476 = vpop.f32.mrf.mxu0
  %v477 = vadd.f32 %v363, %v476
  %478 = vmatmul.f32.gmra.mxu0 %v415
  %v479 = vpop.f32.mrf.mxu0
  %v480 = vadd.f32 %v366, %v479
  %481 = vmatmul.f32.gmra.mxu0 %v418
  %v482 = vpop.f32.mrf.mxu0
  %v483 = vadd.f32 %v369, %v482
  %484 = vmatmul.f32.gmra.mxu0 %v421
  %v485 = vpop.f32.mrf.mxu0
  %v486 = vadd.f32 %v372, %v485
  %487 = vmatmul.f32.gmra.mxu0 %v424
  %v488 = vpop.f32.mrf.mxu0
  %v489 = vadd.f32 %v375, %v488
  %490 = vmatmul.f32.gmra.mxu0 %v427
  %v491 = vpop.f32.mrf.mxu0
  %v492 = vadd.f32 %v378, %v491
  %493 = vmatmul.f32.gmra.mxu0 %v430
  %v494 = vpop.f32.mrf.mxu0
  %v495 = vadd.f32 %v381, %v494
  %496 = vmatmul.f32.gmra.mxu0 %v433
  %v497 = vpop.f32.mrf.mxu0
  %v498 = vadd.f32 %v384, %v497
  %499 = vmatmul.f32.gmra.mxu0 %v436
  %v500 = vpop.f32.mrf.mxu0
  %v501 = vadd.f32 %v387, %v500
  %502 = vmatmul.f32.gmra.mxu0 %v439
  %v503 = vpop.f32.mrf.mxu0
  %v504 = vadd.f32 %v390, %v503
  %505 = vmatmul.f32.gmra.mxu0 %v442
  %v506 = vpop.f32.mrf.mxu0
  %v507 = vadd.f32 %v393, %v506
  %508 = vmatmul.f32.gmra.mxu0 %v445
  %v509 = vpop.f32.mrf.mxu0
  %v510 = vadd.f32 %v396, %v509
  %511 = vmatmul.f32.gmra.mxu0 %v448
  %v512 = vpop.f32.mrf.mxu0
  %v513 = vadd.f32 %v399, %v512
  %514 = vmatmul.f32.gmra.mxu0 %v451
  %v515 = vpop.f32.mrf.mxu0
  %v516 = vadd.f32 %v402, %v515
  %517 = vdwg.mxu0
  %v519 = vperm.slane %v89, 0
  %v522 = vsel %vm404, %v127, 0
  %v525 = vsel %vm404, %v128, 0
  %527 = vmatpush.msra.mxu0 0.0
  %528 = vmatpush.msra.mxu0 0.0
  %529 = vmatpush.msra.mxu0 0.0
  %530 = vmatpush.msra.mxu0 0.0
  %531 = vmatpush.msra.mxu0 0.0
  %532 = vmatpush.msra.mxu0 0.0
  %533 = vmatpush.msra.mxu0 0.0
  %534 = vmatpush.msra.mxu0 0.0
  %535 = vmatpush.msra.mxu0 %v79
  %536 = vmatpush.msra.mxu0 %v78
  %537 = vmatpush.msra.mxu0 %v77
  %538 = vmatpush.msra.mxu0 %v76
  %539 = vmatpush.msra.mxu0 %v75
  %540 = vmatpush.msra.mxu0 %v74
  %541 = vmatpush.msra.mxu0 %v73
  %542 = vmatpush.msra.mxu0 %v72
  %543 = vmatmul.f32.gmra.mxu0 %v522
  %v544 = vpop.f32.mrf.mxu0
  %v545 = vadd.f32 %v519, %v544
  %546 = vmatmul.f32.gmra.mxu0 %v525
  %v547 = vpop.f32.mrf.mxu0
  %v548 = vadd.f32 %v519, %v547
  %549 = vdwg.mxu0
  %v552 = vrot.slane %v545, 1
  %v553 = vrot.slane %v545, 2
  %v554 = vrot.slane %v545, 3
  %v555 = vrot.slane %v545, 4
  %v556 = vrot.slane %v545, 5
  %v557 = vrot.slane %v545, 6
  %v558 = vrot.slane %v545, 7
  %v559 = vrot.slane %v548, 1
  %v560 = vrot.slane %v548, 2
  %v561 = vrot.slane %v548, 3
  %v562 = vrot.slane %v548, 4
  %v563 = vrot.slane %v548, 5
  %v564 = vrot.slane %v548, 6
  %v565 = vrot.slane %v548, 7
  %v566 = vperm.slane %v545, 0
  %v567 = vperm.slane %v552, 0
  %v568 = vperm.slane %v553, 0
  %v569 = vperm.slane %v554, 0
  %v570 = vperm.slane %v555, 0
  %v571 = vperm.slane %v556, 0
  %v572 = vperm.slane %v557, 0
  %v573 = vperm.slane %v558, 0
  %v574 = vperm.slane %v548, 0
  %v575 = vperm.slane %v559, 0
  %v576 = vperm.slane %v560, 0
  %v577 = vperm.slane %v561, 0
  %v578 = vperm.slane %v562, 0
  %v579 = vperm.slane %v563, 0
  %v580 = vperm.slane %v564, 0
  %v581 = vperm.slane %v565, 0
  %v598 = vadd.f32 %v471, %v566
  %v599 = vadd.f32 %v474, %v567
  %v600 = vadd.f32 %v477, %v568
  %v601 = vadd.f32 %v480, %v569
  %v602 = vadd.f32 %v483, %v570
  %v603 = vadd.f32 %v486, %v571
  %v604 = vadd.f32 %v489, %v572
  %v605 = vadd.f32 %v492, %v573
  %v606 = vadd.f32 %v495, %v574
  %v607 = vadd.f32 %v498, %v575
  %v608 = vadd.f32 %v501, %v576
  %v609 = vadd.f32 %v504, %v577
  %v610 = vadd.f32 %v507, %v578
  %v611 = vadd.f32 %v510, %v579
  %v612 = vadd.f32 %v513, %v580
  %v613 = vadd.f32 %v516, %v581
  %v614 = vld [vmem:[%s3] sm:$0x1]
  %v615 = vld [vmem:[%s3 + $0x1] sm:$0x1]
  %v616 = vld [vmem:[%s3 + $0x2] sm:$0x1]
  %v617 = vld [vmem:[%s3 + $0x3] sm:$0x1]
  %v618 = vld [vmem:[%s3 + $0x4] sm:$0x1]
  %v619 = vld [vmem:[%s3 + $0x5] sm:$0x1]
  %v620 = vld [vmem:[%s3 + $0x6] sm:$0x1]
  %v621 = vld [vmem:[%s3 + $0x7] sm:$0x1]
  %v622 = vld [vmem:[%s3 + $0x8] sm:$0x1]
  %v623 = vld [vmem:[%s3 + $0x9] sm:$0x1]
  %v624 = vld [vmem:[%s3 + $0xa] sm:$0x1]
  %v625 = vld [vmem:[%s3 + $0xb] sm:$0x1]
  %v626 = vld [vmem:[%s3 + $0xc] sm:$0x1]
  %v627 = vld [vmem:[%s3 + $0xd] sm:$0x1]
  %v628 = vld [vmem:[%s3 + $0xe] sm:$0x1]
  %v629 = vld [vmem:[%s3 + $0xf] sm:$0x1]
  %vm630 = vcmask 57344
  %v631 = vsel %vm630, %v614, -inf
  %632 = vmax.xlane.f32.xlu0 %v631
  %v633 = vpop.xlane.xlu0 %632
  %v634 = vsel %vm630, %v615, -inf
  %635 = vmax.xlane.f32.xlu0 %v634
  %v636 = vpop.xlane.xlu0 %635
  %v637 = vsel %vm630, %v616, -inf
  %638 = vmax.xlane.f32.xlu0 %v637
  %v639 = vpop.xlane.xlu0 %638
  %v640 = vsel %vm630, %v617, -inf
  %641 = vmax.xlane.f32.xlu0 %v640
  %v642 = vpop.xlane.xlu0 %641
  %v643 = vsel %vm630, %v618, -inf
  %644 = vmax.xlane.f32.xlu0 %v643
  %v645 = vpop.xlane.xlu0 %644
  %v646 = vsel %vm630, %v619, -inf
  %647 = vmax.xlane.f32.xlu0 %v646
  %v648 = vpop.xlane.xlu0 %647
  %v649 = vsel %vm630, %v620, -inf
  %650 = vmax.xlane.f32.xlu0 %v649
  %v651 = vpop.xlane.xlu0 %650
  %v652 = vsel %vm630, %v621, -inf
  %653 = vmax.xlane.f32.xlu0 %v652
  %v654 = vpop.xlane.xlu0 %653
  %v655 = vsel %vm630, %v622, -inf
  %656 = vmax.xlane.f32.xlu0 %v655
  %v657 = vpop.xlane.xlu0 %656
  %v658 = vsel %vm630, %v623, -inf
  %659 = vmax.xlane.f32.xlu0 %v658
  %v660 = vpop.xlane.xlu0 %659
  %v661 = vsel %vm630, %v624, -inf
  %662 = vmax.xlane.f32.xlu0 %v661
  %v663 = vpop.xlane.xlu0 %662
  %v664 = vsel %vm630, %v625, -inf
  %665 = vmax.xlane.f32.xlu0 %v664
  %v666 = vpop.xlane.xlu0 %665
  %v667 = vsel %vm630, %v626, -inf
  %668 = vmax.xlane.f32.xlu0 %v667
  %v669 = vpop.xlane.xlu0 %668
  %v670 = vsel %vm630, %v627, -inf
  %671 = vmax.xlane.f32.xlu0 %v670
  %v672 = vpop.xlane.xlu0 %671
  %v673 = vsel %vm630, %v628, -inf
  %674 = vmax.xlane.f32.xlu0 %v673
  %v675 = vpop.xlane.xlu0 %674
  %v676 = vsel %vm630, %v629, -inf
  %677 = vmax.xlane.f32.xlu0 %v676
  %v678 = vpop.xlane.xlu0 %677
  %v679 = vsub.f32 %v614, %v633
  %v680 = vsub.f32 %v615, %v636
  %v681 = vsub.f32 %v616, %v639
  %v682 = vsub.f32 %v617, %v642
  %v683 = vsub.f32 %v618, %v645
  %v684 = vsub.f32 %v619, %v648
  %v685 = vsub.f32 %v620, %v651
  %v686 = vsub.f32 %v621, %v654
  %v687 = vsub.f32 %v622, %v657
  %v688 = vsub.f32 %v623, %v660
  %v689 = vsub.f32 %v624, %v663
  %v690 = vsub.f32 %v625, %v666
  %v691 = vsub.f32 %v626, %v669
  %v692 = vsub.f32 %v627, %v672
  %v693 = vsub.f32 %v628, %v675
  %v694 = vsub.f32 %v629, %v678
  %v695 = vmul.f32 %v679, 1.442695
  %v696 = vpow.pop %v695
  %v697 = vmul.f32 %v680, 1.442695
  %v698 = vpow.pop %v697
  %v699 = vmul.f32 %v681, 1.442695
  %v700 = vpow.pop %v699
  %v701 = vmul.f32 %v682, 1.442695
  %v702 = vpow.pop %v701
  %v703 = vmul.f32 %v683, 1.442695
  %v704 = vpow.pop %v703
  %v705 = vmul.f32 %v684, 1.442695
  %v706 = vpow.pop %v705
  %v707 = vmul.f32 %v685, 1.442695
  %v708 = vpow.pop %v707
  %v709 = vmul.f32 %v686, 1.442695
  %v710 = vpow.pop %v709
  %v711 = vmul.f32 %v687, 1.442695
  %v712 = vpow.pop %v711
  %v713 = vmul.f32 %v688, 1.442695
  %v714 = vpow.pop %v713
  %v715 = vmul.f32 %v689, 1.442695
  %v716 = vpow.pop %v715
  %v717 = vmul.f32 %v690, 1.442695
  %v718 = vpow.pop %v717
  %v719 = vmul.f32 %v691, 1.442695
  %v720 = vpow.pop %v719
  %v721 = vmul.f32 %v692, 1.442695
  %v722 = vpow.pop %v721
  %v723 = vmul.f32 %v693, 1.442695
  %v724 = vpow.pop %v723
  %v725 = vmul.f32 %v694, 1.442695
  %v726 = vpow.pop %v725
  %v727 = vsel %vm630, %v696, 0.0
  %728 = vadd.xlane.f32.xlu0 %v727
  %v729 = vpop.xlane.xlu0 %728
  %v730 = vsel %vm630, %v698, 0.0
  %731 = vadd.xlane.f32.xlu0 %v730
  %v732 = vpop.xlane.xlu0 %731
  %v733 = vsel %vm630, %v700, 0.0
  %734 = vadd.xlane.f32.xlu0 %v733
  %v735 = vpop.xlane.xlu0 %734
  %v736 = vsel %vm630, %v702, 0.0
  %737 = vadd.xlane.f32.xlu0 %v736
  %v738 = vpop.xlane.xlu0 %737
  %v739 = vsel %vm630, %v704, 0.0
  %740 = vadd.xlane.f32.xlu0 %v739
  %v741 = vpop.xlane.xlu0 %740
  %v742 = vsel %vm630, %v706, 0.0
  %743 = vadd.xlane.f32.xlu0 %v742
  %v744 = vpop.xlane.xlu0 %743
  %v745 = vsel %vm630, %v708, 0.0
  %746 = vadd.xlane.f32.xlu0 %v745
  %v747 = vpop.xlane.xlu0 %746
  %v748 = vsel %vm630, %v710, 0.0
  %749 = vadd.xlane.f32.xlu0 %v748
  %v750 = vpop.xlane.xlu0 %749
  %v751 = vsel %vm630, %v712, 0.0
  %752 = vadd.xlane.f32.xlu0 %v751
  %v753 = vpop.xlane.xlu0 %752
  %v754 = vsel %vm630, %v714, 0.0
  %755 = vadd.xlane.f32.xlu0 %v754
  %v756 = vpop.xlane.xlu0 %755
  %v757 = vsel %vm630, %v716, 0.0
  %758 = vadd.xlane.f32.xlu0 %v757
  %v759 = vpop.xlane.xlu0 %758
  %v760 = vsel %vm630, %v718, 0.0
  %761 = vadd.xlane.f32.xlu0 %v760
  %v762 = vpop.xlane.xlu0 %761
  %v763 = vsel %vm630, %v720, 0.0
  %764 = vadd.xlane.f32.xlu0 %v763
  %v765 = vpop.xlane.xlu0 %764
  %v766 = vsel %vm630, %v722, 0.0
  %767 = vadd.xlane.f32.xlu0 %v766
  %v768 = vpop.xlane.xlu0 %767
  %v769 = vsel %vm630, %v724, 0.0
  %770 = vadd.xlane.f32.xlu0 %v769
  %v771 = vpop.xlane.xlu0 %770
  %v772 = vsel %vm630, %v726, 0.0
  %773 = vadd.xlane.f32.xlu0 %v772
  %v774 = vpop.xlane.xlu0 %773
  %v775 = vrcp.pop %v729
  %v776 = vrcp.pop %v732
  %v777 = vrcp.pop %v735
  %v778 = vrcp.pop %v738
  %v779 = vrcp.pop %v741
  %v780 = vrcp.pop %v744
  %v781 = vrcp.pop %v747
  %v782 = vrcp.pop %v750
  %v783 = vrcp.pop %v753
  %v784 = vrcp.pop %v756
  %v785 = vrcp.pop %v759
  %v786 = vrcp.pop %v762
  %v787 = vrcp.pop %v765
  %v788 = vrcp.pop %v768
  %v789 = vrcp.pop %v771
  %v790 = vrcp.pop %v774
  %v791 = vmul.f32 %v696, %v775
  %v792 = vmul.f32 %v698, %v776
  %v793 = vmul.f32 %v700, %v777
  %v794 = vmul.f32 %v702, %v778
  %v795 = vmul.f32 %v704, %v779
  %v796 = vmul.f32 %v706, %v780
  %v797 = vmul.f32 %v708, %v781
  %v798 = vmul.f32 %v710, %v782
  %v799 = vmul.f32 %v712, %v783
  %v800 = vmul.f32 %v714, %v784
  %v801 = vmul.f32 %v716, %v785
  %v802 = vmul.f32 %v718, %v786
  %v803 = vmul.f32 %v720, %v787
  %v804 = vmul.f32 %v722, %v788
  %v805 = vmul.f32 %v724, %v789
  %v806 = vmul.f32 %v726, %v790
  %v808 = vsel %vm290, %v791, 0
  %810 = vmatpush.msra.mxu0 0.0
  %811 = vmatpush.msra.mxu0 0.0
  %812 = vmatpush.msra.mxu0 0.0
  %813 = vmatpush.msra.mxu0 0.0
  %814 = vmatpush.msra.mxu0 0.0
  %815 = vmatpush.msra.mxu0 0.0
  %816 = vmatpush.msra.mxu0 0.0
  %817 = vmatpush.msra.mxu0 0.0
  %818 = vmatpush.msra.mxu0 0.0
  %819 = vmatpush.msra.mxu0 0.0
  %820 = vmatpush.msra.mxu0 0.0
  %821 = vmatpush.msra.mxu0 0.0
  %822 = vmatpush.msra.mxu0 0.0
  %823 = vmatpush.msra.mxu0 0.0
  %824 = vmatpush.msra.mxu0 0.0
  %825 = vmatpush.msra.mxu0 %v598
  %826 = vmatmul.f32.gmra.mxu0 %v808
  %v827 = vpop.f32.mrf.mxu0
  %v828 = vadd.f32 0.0, %v827
  %829 = vdwg.mxu0
  %v831 = vsel %vm290, %v792, 0
  %833 = vmatpush.msra.mxu0 0.0
  %834 = vmatpush.msra.mxu0 0.0
  %835 = vmatpush.msra.mxu0 0.0
  %836 = vmatpush.msra.mxu0 0.0
  %837 = vmatpush.msra.mxu0 0.0
  %838 = vmatpush.msra.mxu0 0.0
  %839 = vmatpush.msra.mxu0 0.0
  %840 = vmatpush.msra.mxu0 0.0
  %841 = vmatpush.msra.mxu0 0.0
  %842 = vmatpush.msra.mxu0 0.0
  %843 = vmatpush.msra.mxu0 0.0
  %844 = vmatpush.msra.mxu0 0.0
  %845 = vmatpush.msra.mxu0 0.0
  %846 = vmatpush.msra.mxu0 0.0
  %847 = vmatpush.msra.mxu0 0.0
  %848 = vmatpush.msra.mxu0 %v599
  %849 = vmatmul.f32.gmra.mxu0 %v831
  %v850 = vpop.f32.mrf.mxu0
  %v851 = vadd.f32 0.0, %v850
  %852 = vdwg.mxu0
  %v854 = vsel %vm290, %v793, 0
  %856 = vmatpush.msra.mxu0 0.0
  %857 = vmatpush.msra.mxu0 0.0
  %858 = vmatpush.msra.mxu0 0.0
  %859 = vmatpush.msra.mxu0 0.0
  %860 = vmatpush.msra.mxu0 0.0
  %861 = vmatpush.msra.mxu0 0.0
  %862 = vmatpush.msra.mxu0 0.0
  %863 = vmatpush.msra.mxu0 0.0
  %864 = vmatpush.msra.mxu0 0.0
  %865 = vmatpush.msra.mxu0 0.0
  %866 = vmatpush.msra.mxu0 0.0
  %867 = vmatpush.msra.mxu0 0.0
  %868 = vmatpush.msra.mxu0 0.0
  %869 = vmatpush.msra.mxu0 0.0
  %870 = vmatpush.msra.mxu0 0.0
  %871 = vmatpush.msra.mxu0 %v600
  %872 = vmatmul.f32.gmra.mxu0 %v854
  %v873 = vpop.f32.mrf.mxu0
  %v874 = vadd.f32 0.0, %v873
  %875 = vdwg.mxu0
  %v877 = vsel %vm290, %v794, 0
  %879 = vmatpush.msra.mxu0 0.0
  %880 = vmatpush.msra.mxu0 0.0
  %881 = vmatpush.msra.mxu0 0.0
  %882 = vmatpush.msra.mxu0 0.0
  %883 = vmatpush.msra.mxu0 0.0
  %884 = vmatpush.msra.mxu0 0.0
  %885 = vmatpush.msra.mxu0 0.0
  %886 = vmatpush.msra.mxu0 0.0
  %887 = vmatpush.msra.mxu0 0.0
  %888 = vmatpush.msra.mxu0 0.0
  %889 = vmatpush.msra.mxu0 0.0
  %890 = vmatpush.msra.mxu0 0.0
  %891 = vmatpush.msra.mxu0 0.0
  %892 = vmatpush.msra.mxu0 0.0
  %893 = vmatpush.msra.mxu0 0.0
  %894 = vmatpush.msra.mxu0 %v601
  %895 = vmatmul.f32.gmra.mxu0 %v877
  %v896 = vpop.f32.mrf.mxu0
  %v897 = vadd.f32 0.0, %v896
  %898 = vdwg.mxu0
  %v900 = vsel %vm290, %v795, 0
  %902 = vmatpush.msra.mxu0 0.0
  %903 = vmatpush.msra.mxu0 0.0
  %904 = vmatpush.msra.mxu0 0.0
  %905 = vmatpush.msra.mxu0 0.0
  %906 = vmatpush.msra.mxu0 0.0
  %907 = vmatpush.msra.mxu0 0.0
  %908 = vmatpush.msra.mxu0 0.0
  %909 = vmatpush.msra.mxu0 0.0
  %910 = vmatpush.msra.mxu0 0.0
  %911 = vmatpush.msra.mxu0 0.0
  %912 = vmatpush.msra.mxu0 0.0
  %913 = vmatpush.msra.mxu0 0.0
  %914 = vmatpush.msra.mxu0 0.0
  %915 = vmatpush.msra.mxu0 0.0
  %916 = vmatpush.msra.mxu0 0.0
  %917 = vmatpush.msra.mxu0 %v602
  %918 = vmatmul.f32.gmra.mxu0 %v900
  %v919 = vpop.f32.mrf.mxu0
  %v920 = vadd.f32 0.0, %v919
  %921 = vdwg.mxu0
  %v923 = vsel %vm290, %v796, 0
  %925 = vmatpush.msra.mxu0 0.0
  %926 = vmatpush.msra.mxu0 0.0
  %927 = vmatpush.msra.mxu0 0.0
  %928 = vmatpush.msra.mxu0 0.0
  %929 = vmatpush.msra.mxu0 0.0
  %930 = vmatpush.msra.mxu0 0.0
  %931 = vmatpush.msra.mxu0 0.0
  %932 = vmatpush.msra.mxu0 0.0
  %933 = vmatpush.msra.mxu0 0.0
  %934 = vmatpush.msra.mxu0 0.0
  %935 = vmatpush.msra.mxu0 0.0
  %936 = vmatpush.msra.mxu0 0.0
  %937 = vmatpush.msra.mxu0 0.0
  %938 = vmatpush.msra.mxu0 0.0
  %939 = vmatpush.msra.mxu0 0.0
  %940 = vmatpush.msra.mxu0 %v603
  %941 = vmatmul.f32.gmra.mxu0 %v923
  %v942 = vpop.f32.mrf.mxu0
  %v943 = vadd.f32 0.0, %v942
  %944 = vdwg.mxu0
  %v946 = vsel %vm290, %v797, 0
  %948 = vmatpush.msra.mxu0 0.0
  %949 = vmatpush.msra.mxu0 0.0
  %950 = vmatpush.msra.mxu0 0.0
  %951 = vmatpush.msra.mxu0 0.0
  %952 = vmatpush.msra.mxu0 0.0
  %953 = vmatpush.msra.mxu0 0.0
  %954 = vmatpush.msra.mxu0 0.0
  %955 = vmatpush.msra.mxu0 0.0
  %956 = vmatpush.msra.mxu0 0.0
  %957 = vmatpush.msra.mxu0 0.0
  %958 = vmatpush.msra.mxu0 0.0
  %959 = vmatpush.msra.mxu0 0.0
  %960 = vmatpush.msra.mxu0 0.0
  %961 = vmatpush.msra.mxu0 0.0
  %962 = vmatpush.msra.mxu0 0.0
  %963 = vmatpush.msra.mxu0 %v604
  %964 = vmatmul.f32.gmra.mxu0 %v946
  %v965 = vpop.f32.mrf.mxu0
  %v966 = vadd.f32 0.0, %v965
  %967 = vdwg.mxu0
  %v969 = vsel %vm290, %v798, 0
  %971 = vmatpush.msra.mxu0 0.0
  %972 = vmatpush.msra.mxu0 0.0
  %973 = vmatpush.msra.mxu0 0.0
  %974 = vmatpush.msra.mxu0 0.0
  %975 = vmatpush.msra.mxu0 0.0
  %976 = vmatpush.msra.mxu0 0.0
  %977 = vmatpush.msra.mxu0 0.0
  %978 = vmatpush.msra.mxu0 0.0
  %979 = vmatpush.msra.mxu0 0.0
  %980 = vmatpush.msra.mxu0 0.0
  %981 = vmatpush.msra.mxu0 0.0
  %982 = vmatpush.msra.mxu0 0.0
  %983 = vmatpush.msra.mxu0 0.0
  %984 = vmatpush.msra.mxu0 0.0
  %985 = vmatpush.msra.mxu0 0.0
  %986 = vmatpush.msra.mxu0 %v605
  %987 = vmatmul.f32.gmra.mxu0 %v969
  %v988 = vpop.f32.mrf.mxu0
  %v989 = vadd.f32 0.0, %v988
  %990 = vdwg.mxu0
  %v992 = vsel %vm290, %v799, 0
  %994 = vmatpush.msra.mxu0 0.0
  %995 = vmatpush.msra.mxu0 0.0
  %996 = vmatpush.msra.mxu0 0.0
  %997 = vmatpush.msra.mxu0 0.0
  %998 = vmatpush.msra.mxu0 0.0
  %999 = vmatpush.msra.mxu0 0.0
  %1000 = vmatpush.msra.mxu0 0.0
  %1001 = vmatpush.msra.mxu0 0.0
  %1002 = vmatpush.msra.mxu0 0.0
  %1003 = vmatpush.msra.mxu0 0.0
  %1004 = vmatpush.msra.mxu0 0.0
  %1005 = vmatpush.msra.mxu0 0.0
  %1006 = vmatpush.msra.mxu0 0.0
  %1007 = vmatpush.msra.mxu0 0.0
  %1008 = vmatpush.msra.mxu0 0.0
  %1009 = vmatpush.msra.mxu0 %v606
  %1010 = vmatmul.f32.gmra.mxu0 %v992
  %v1011 = vpop.f32.mrf.mxu0
  %v1012 = vadd.f32 0.0, %v1011
  %1013 = vdwg.mxu0
  %v1015 = vsel %vm290, %v800, 0
  %1017 = vmatpush.msra.mxu0 0.0
  %1018 = vmatpush.msra.mxu0 0.0
  %1019 = vmatpush.msra.mxu0 0.0
  %1020 = vmatpush.msra.mxu0 0.0
  %1021 = vmatpush.msra.mxu0 0.0
  %1022 = vmatpush.msra.mxu0 0.0
  %1023 = vmatpush.msra.mxu0 0.0
  %1024 = vmatpush.msra.mxu0 0.0
  %1025 = vmatpush.msra.mxu0 0.0
  %1026 = vmatpush.msra.mxu0 0.0
  %1027 = vmatpush.msra.mxu0 0.0
  %1028 = vmatpush.msra.mxu0 0.0
  %1029 = vmatpush.msra.mxu0 0.0
  %1030 = vmatpush.msra.mxu0 0.0
  %1031 = vmatpush.msra.mxu0 0.0
  %1032 = vmatpush.msra.mxu0 %v607
  %1033 = vmatmul.f32.gmra.mxu0 %v1015
  %v1034 = vpop.f32.mrf.mxu0
  %v1035 = vadd.f32 0.0, %v1034
  %1036 = vdwg.mxu0
  %v1038 = vsel %vm290, %v801, 0
  %1040 = vmatpush.msra.mxu0 0.0
  %1041 = vmatpush.msra.mxu0 0.0
  %1042 = vmatpush.msra.mxu0 0.0
  %1043 = vmatpush.msra.mxu0 0.0
  %1044 = vmatpush.msra.mxu0 0.0
  %1045 = vmatpush.msra.mxu0 0.0
  %1046 = vmatpush.msra.mxu0 0.0
  %1047 = vmatpush.msra.mxu0 0.0
  %1048 = vmatpush.msra.mxu0 0.0
  %1049 = vmatpush.msra.mxu0 0.0
  %1050 = vmatpush.msra.mxu0 0.0
  %1051 = vmatpush.msra.mxu0 0.0
  %1052 = vmatpush.msra.mxu0 0.0
  %1053 = vmatpush.msra.mxu0 0.0
  %1054 = vmatpush.msra.mxu0 0.0
  %1055 = vmatpush.msra.mxu0 %v608
  %1056 = vmatmul.f32.gmra.mxu0 %v1038
  %v1057 = vpop.f32.mrf.mxu0
  %v1058 = vadd.f32 0.0, %v1057
  %1059 = vdwg.mxu0
  %v1061 = vsel %vm290, %v802, 0
  %1063 = vmatpush.msra.mxu0 0.0
  %1064 = vmatpush.msra.mxu0 0.0
  %1065 = vmatpush.msra.mxu0 0.0
  %1066 = vmatpush.msra.mxu0 0.0
  %1067 = vmatpush.msra.mxu0 0.0
  %1068 = vmatpush.msra.mxu0 0.0
  %1069 = vmatpush.msra.mxu0 0.0
  %1070 = vmatpush.msra.mxu0 0.0
  %1071 = vmatpush.msra.mxu0 0.0
  %1072 = vmatpush.msra.mxu0 0.0
  %1073 = vmatpush.msra.mxu0 0.0
  %1074 = vmatpush.msra.mxu0 0.0
  %1075 = vmatpush.msra.mxu0 0.0
  %1076 = vmatpush.msra.mxu0 0.0
  %1077 = vmatpush.msra.mxu0 0.0
  %1078 = vmatpush.msra.mxu0 %v609
  %1079 = vmatmul.f32.gmra.mxu0 %v1061
  %v1080 = vpop.f32.mrf.mxu0
  %v1081 = vadd.f32 0.0, %v1080
  %1082 = vdwg.mxu0
  %v1084 = vsel %vm290, %v803, 0
  %1086 = vmatpush.msra.mxu0 0.0
  %1087 = vmatpush.msra.mxu0 0.0
  %1088 = vmatpush.msra.mxu0 0.0
  %1089 = vmatpush.msra.mxu0 0.0
  %1090 = vmatpush.msra.mxu0 0.0
  %1091 = vmatpush.msra.mxu0 0.0
  %1092 = vmatpush.msra.mxu0 0.0
  %1093 = vmatpush.msra.mxu0 0.0
  %1094 = vmatpush.msra.mxu0 0.0
  %1095 = vmatpush.msra.mxu0 0.0
  %1096 = vmatpush.msra.mxu0 0.0
  %1097 = vmatpush.msra.mxu0 0.0
  %1098 = vmatpush.msra.mxu0 0.0
  %1099 = vmatpush.msra.mxu0 0.0
  %1100 = vmatpush.msra.mxu0 0.0
  %1101 = vmatpush.msra.mxu0 %v610
  %1102 = vmatmul.f32.gmra.mxu0 %v1084
  %v1103 = vpop.f32.mrf.mxu0
  %v1104 = vadd.f32 0.0, %v1103
  %1105 = vdwg.mxu0
  %v1107 = vsel %vm290, %v804, 0
  %1109 = vmatpush.msra.mxu0 0.0
  %1110 = vmatpush.msra.mxu0 0.0
  %1111 = vmatpush.msra.mxu0 0.0
  %1112 = vmatpush.msra.mxu0 0.0
  %1113 = vmatpush.msra.mxu0 0.0
  %1114 = vmatpush.msra.mxu0 0.0
  %1115 = vmatpush.msra.mxu0 0.0
  %1116 = vmatpush.msra.mxu0 0.0
  %1117 = vmatpush.msra.mxu0 0.0
  %1118 = vmatpush.msra.mxu0 0.0
  %1119 = vmatpush.msra.mxu0 0.0
  %1120 = vmatpush.msra.mxu0 0.0
  %1121 = vmatpush.msra.mxu0 0.0
  %1122 = vmatpush.msra.mxu0 0.0
  %1123 = vmatpush.msra.mxu0 0.0
  %1124 = vmatpush.msra.mxu0 %v611
  %1125 = vmatmul.f32.gmra.mxu0 %v1107
  %v1126 = vpop.f32.mrf.mxu0
  %v1127 = vadd.f32 0.0, %v1126
  %1128 = vdwg.mxu0
  %v1130 = vsel %vm290, %v805, 0
  %1132 = vmatpush.msra.mxu0 0.0
  %1133 = vmatpush.msra.mxu0 0.0
  %1134 = vmatpush.msra.mxu0 0.0
  %1135 = vmatpush.msra.mxu0 0.0
  %1136 = vmatpush.msra.mxu0 0.0
  %1137 = vmatpush.msra.mxu0 0.0
  %1138 = vmatpush.msra.mxu0 0.0
  %1139 = vmatpush.msra.mxu0 0.0
  %1140 = vmatpush.msra.mxu0 0.0
  %1141 = vmatpush.msra.mxu0 0.0
  %1142 = vmatpush.msra.mxu0 0.0
  %1143 = vmatpush.msra.mxu0 0.0
  %1144 = vmatpush.msra.mxu0 0.0
  %1145 = vmatpush.msra.mxu0 0.0
  %1146 = vmatpush.msra.mxu0 0.0
  %1147 = vmatpush.msra.mxu0 %v612
  %1148 = vmatmul.f32.gmra.mxu0 %v1130
  %v1149 = vpop.f32.mrf.mxu0
  %v1150 = vadd.f32 0.0, %v1149
  %1151 = vdwg.mxu0
  %v1153 = vsel %vm290, %v806, 0
  %1155 = vmatpush.msra.mxu0 0.0
  %1156 = vmatpush.msra.mxu0 0.0
  %1157 = vmatpush.msra.mxu0 0.0
  %1158 = vmatpush.msra.mxu0 0.0
  %1159 = vmatpush.msra.mxu0 0.0
  %1160 = vmatpush.msra.mxu0 0.0
  %1161 = vmatpush.msra.mxu0 0.0
  %1162 = vmatpush.msra.mxu0 0.0
  %1163 = vmatpush.msra.mxu0 0.0
  %1164 = vmatpush.msra.mxu0 0.0
  %1165 = vmatpush.msra.mxu0 0.0
  %1166 = vmatpush.msra.mxu0 0.0
  %1167 = vmatpush.msra.mxu0 0.0
  %1168 = vmatpush.msra.mxu0 0.0
  %1169 = vmatpush.msra.mxu0 0.0
  %1170 = vmatpush.msra.mxu0 %v613
  %1171 = vmatmul.f32.gmra.mxu0 %v1153
  %v1172 = vpop.f32.mrf.mxu0
  %v1173 = vadd.f32 0.0, %v1172
  %1174 = vdwg.mxu0
  %1175 = vst.msk [vmem:[%s10] sm:$0x1] %vm630, %v828
  %1176 = vst.msk [vmem:[%s10 + $0x1] sm:$0x1] %vm630, %v851
  %1177 = vst.msk [vmem:[%s10 + $0x2] sm:$0x1] %vm630, %v874
  %1178 = vst.msk [vmem:[%s10 + $0x3] sm:$0x1] %vm630, %v897
  %1179 = vst.msk [vmem:[%s10 + $0x4] sm:$0x1] %vm630, %v920
  %1180 = vst.msk [vmem:[%s10 + $0x5] sm:$0x1] %vm630, %v943
  %1181 = vst.msk [vmem:[%s10 + $0x6] sm:$0x1] %vm630, %v966
  %1182 = vst.msk [vmem:[%s10 + $0x7] sm:$0x1] %vm630, %v989
  %1183 = vst.msk [vmem:[%s10 + $0x8] sm:$0x1] %vm630, %v1012
  %1184 = vst.msk [vmem:[%s10 + $0x9] sm:$0x1] %vm630, %v1035
  %1185 = vst.msk [vmem:[%s10 + $0xa] sm:$0x1] %vm630, %v1058
  %1186 = vst.msk [vmem:[%s10 + $0xb] sm:$0x1] %vm630, %v1081
  %1187 = vst.msk [vmem:[%s10 + $0xc] sm:$0x1] %vm630, %v1104
  %1188 = vst.msk [vmem:[%s10 + $0xd] sm:$0x1] %vm630, %v1127
  %1189 = vst.msk [vmem:[%s10 + $0xe] sm:$0x1] %vm630, %v1150
  %1190 = vst.msk [vmem:[%s10 + $0xf] sm:$0x1] %vm630, %v1173
  // Predicated region
  $region42: #{tpu_custom_call.1} parent=0 // pred_check
    _
  $region43: #{tpu_custom_call.1} parent=0 // pred_check_branch
    %1192 = sbr.rel (0) target = $region45
  $region44: #{tpu_custom_call.1} parent=0 // pred_region
    _
  $region45: #{tpu_custom_call.1} parent=0 // pred_fallthru
    _
  // Predicated region
  $region46: #{tpu_custom_call.1} parent=0 // pred_check
    _
  $region47: #{tpu_custom_call.1} parent=0 // pred_check_branch
    %1194 = sbr.rel (0) target = $region49
  $region48: #{tpu_custom_call.1} parent=0 // pred_region
    _
  $region49: #{tpu_custom_call.1} parent=0 // pred_fallthru
    _

</llo_original>
